<compile_context>
chip_gen: v6e
topology: v6e:2x2x1
jax: 0.10.0
libtpu: 0.0.40
codegen_flags: <defaults>
</compile_context>

<pallas_src>
import functools

import jax
import jax.numpy as jnp
from jax.experimental import pallas as pl
from jax.experimental.pallas import tpu as pltpu


def _choose_tiles(n: int, f: int):
    """Pick (tm, tf): row (sublane) tile and feature (lane) tile, sized by bytes."""
    TARGET_ELEMS = (1 << 20) // 4  # ~1 MiB of f32 per x block

    # Feature (lane) tile: whole F when moderate, otherwise stream F in
    # lane-aligned chunks and reduce over an F grid axis.
    if f <= 4096:
        tf = f
    else:
        tf = 2048  # multiple of 128 -> legal block last dim

    # Row (sublane) tile: fill the byte budget, multiple of 8.
    tm = max(8, (TARGET_ELEMS // max(tf, 1)) // 8 * 8)

    # Keep >= 2 row tiles when possible so dimension_semantics=("parallel", ...)
    # can shard the row axis across both TensorCores on v7x.
    half = (n // 2) // 8 * 8
    if half >= 8:
        tm = min(tm, half)

    if tm >= n:
        tm = n  # full-dim block (always legal, even if n is not a multiple of 8)
    return tm, tf


def _matvec_kernel(x_ref, w_ref, o_ref, acc_ref, *, tf: int, f_total: int,
                   needs_mask: bool):
    # x_ref : (tm, tf)  -- batch rows on sublanes, feature chunk on lanes
    # w_ref : (1, tf)   -- lane-dense weight row, sublane-broadcast
    # o_ref : (tm, 1)   -- per-row dot product (resident across the F axis)
    # acc_ref: (tm, 1) f32 VMEM accumulator
    fb = pl.program_id(1)

    @pl.when(fb == 0)
    def _init():
        acc_ref[...] = jnp.zeros_like(acc_ref)

    prod = x_ref[...].astype(jnp.float32) * w_ref[...].astype(jnp.float32)  # VPU
    if needs_mask:
        # Zero out-of-bounds feature lanes of the partial last F block so
        # unspecified VMEM contents cannot contaminate the reduction.
        col = fb * tf + jax.lax.broadcasted_iota(jnp.int32, prod.shape, 1)
        prod = jnp.where(col < f_total, prod, 0.0)
    acc_ref[...] += jnp.sum(prod, axis=1, keepdims=True)                    # XLU

    @pl.when(fb == pl.num_programs(1) - 1)
    def _finalize():
        o_ref[...] = acc_ref[...].astype(o_ref.dtype)


def model_forward(x: jax.Array, w: jax.Array) -> jax.Array:
    """x: (N, F), w: (F, 1)  ->  (N,)  ==  (x @ w).mean(1)."""
    n, f = x.shape
    assert w.shape == (f, 1)

    w_row = w.reshape(1, f)  # lane-dense weight row (tiny, cheap reshape)

    tm, tf = _choose_tiles(n, f)
    grid = (pl.cdiv(n, tm), pl.cdiv(f, tf))
    needs_mask = (grid[1] * tf) != f

    kernel = functools.partial(_matvec_kernel, tf=tf, f_total=f,
                               needs_mask=needs_mask)

    out = pl.pallas_call(
        kernel,
        out_shape=jax.ShapeDtypeStruct((n, 1), x.dtype),
        grid=grid,
        in_specs=[
            pl.BlockSpec((tm, tf), lambda i, fb: (i, fb)),   # x: native layout
            pl.BlockSpec((1, tf), lambda i, fb: (0, fb)),    # w: lane-dense row
        ],
        out_specs=pl.BlockSpec((tm, 1), lambda i, fb: (i, 0)),
        scratch_shapes=[pltpu.VMEM((tm, 1), jnp.float32)],   # f32 accumulator
        compiler_params=pltpu.CompilerParams(
            dimension_semantics=("parallel", "arbitrary"),
            vmem_limit_bytes=32 * 1024 * 1024,               # explicit (v5e: 16 MiB default)
        ),
    )(x, w_row)
    return out[:, 0]


def init_orthogonal_column(key, in_features: int) -> jax.Array:
    # torch.nn.init.orthogonal_ on an (in_features, 1) matrix yields a
    # unit-norm column vector; reproduce that deterministically.
    v = jax.random.normal(key, (in_features, 1), dtype=jnp.float32)
    return v / jnp.linalg.norm(v)


# TODO(synk): GrowableLinear.add_feature / Model.add_layer are training-time
# graph-surgery utilities, not part of the forward pass, and are not ported.

if __name__ == "__main__":
    key = jax.random.PRNGKey(0)
    kx, kw, kx2, kw2 = jax.random.split(key, 4)

    # Small shapes matching the module's forward (single (F, 1) linear + mean).
    batch, in_features = 8, 32
    x = jax.random.normal(kx, (batch, in_features), dtype=jnp.float32)
    w = init_orthogonal_column(kw, in_features)

    out = model_forward(x, w)
    jax.block_until_ready(out)
    ref = jnp.mean(x @ w, axis=1)
    assert out.shape == (batch,)
    assert jnp.allclose(out, ref, atol=1e-5, rtol=1e-5)

    # Second check exercising the multi-tile path: ragged batch (not a multiple
    # of 8), large F that triggers the F-reduction axis and the OOB-lane mask.
    n2, f2 = 300, 4500
    x2 = jax.random.normal(kx2, (n2, f2), dtype=jnp.float32)
    w2 = init_orthogonal_column(kw2, f2)
    out2 = model_forward(x2, w2)
    jax.block_until_ready(out2)
    ref2 = jnp.mean(x2 @ w2, axis=1)
    assert out2.shape == (n2,)
    assert jnp.allclose(out2, ref2, atol=1e-4, rtol=1e-4)

    print("KERNEL_OK")
</pallas_src>

<mosaic_0001>
module attributes {stable_mosaic.version = 11 : i64} {
  func.func @_matvec_kernel(%arg0: i32, %arg1: i32, %arg2: memref<8x32xf32, #tpu.memory_space<vmem>>, %arg3: memref<1x32xf32, #tpu.memory_space<vmem>>, %arg4: memref<8x1xf32, #tpu.memory_space<vmem>>, %arg5: memref<8x1xf32, #tpu.memory_space<vmem>>) attributes {dimension_semantics = [#tpu.dimension_semantics<parallel>, #tpu.dimension_semantics<arbitrary>], iteration_bounds = array<i64: 1, 1>, scalar_prefetch = 0 : i64, scratch_operands = 1 : i64, tpu.core_type = #tpu.core_type<tc>, window_params = [{transform_indices = @transform_0, window_bounds = array<i64: 8, 32>}, {transform_indices = @transform_1, window_bounds = array<i64: 1, 32>}, {transform_indices = @transform_2, window_bounds = array<i64: 8, 1>}]} {
    %c0_i32 = arith.constant 0 : i32
    %0 = arith.cmpi eq, %arg1, %c0_i32 : i32
    %1 = arith.extui %0 : i1 to i32
    %c0_i32_0 = arith.constant 0 : i32
    %2 = arith.cmpi ne, %1, %c0_i32_0 : i32
    scf.if %2 {
      %cst_10 = arith.constant 0.000000e+00 : f32
      %15 = vector.broadcast %cst_10 : f32 to vector<8x1xf32>
      %c0_11 = arith.constant 0 : index
      %c0_12 = arith.constant 0 : index
      %16 = vector.load %arg5[%c0_11, %c0_12] : memref<8x1xf32, #tpu.memory_space<vmem>>, vector<8x1xf32>
      tpu.vector_store %arg5[%c0_11, %c0_12], %15 {strides = array<i32>} : memref<8x1xf32, #tpu.memory_space<vmem>>, vector<8x1xf32>,
    } else {
    }
    %c0 = arith.constant 0 : index
    %c0_1 = arith.constant 0 : index
    %3 = vector.load %arg2[%c0, %c0_1] : memref<8x32xf32, #tpu.memory_space<vmem>>, vector<8x32xf32>
    %c0_2 = arith.constant 0 : index
    %c0_3 = arith.constant 0 : index
    %4 = vector.load %arg3[%c0_2, %c0_3] : memref<1x32xf32, #tpu.memory_space<vmem>>, vector<1x32xf32>
    %5 = vector.broadcast %4 : vector<1x32xf32> to vector<8x32xf32>
    %6 = arith.mulf %3, %5 : vector<8x32xf32>
    %c0_4 = arith.constant 0 : index
    %c0_5 = arith.constant 0 : index
    %7 = vector.load %arg5[%c0_4, %c0_5] : memref<8x1xf32, #tpu.memory_space<vmem>>, vector<8x1xf32>
    %cst = arith.constant dense<0.000000e+00> : vector<8xf32>
    %8 = vector.multi_reduction <add>, %6, %cst [1] : vector<8x32xf32> to vector<8xf32>
    %9 = vector.shape_cast %8 : vector<8xf32> to vector<8x1xf32>
    %10 = arith.addf %7, %9 : vector<8x1xf32>
    %c0_6 = arith.constant 0 : index
    %c0_7 = arith.constant 0 : index
    %11 = vector.load %arg5[%c0_6, %c0_7] : memref<8x1xf32, #tpu.memory_space<vmem>>, vector<8x1xf32>
    tpu.vector_store %arg5[%c0_6, %c0_7], %10 {strides = array<i32>} : memref<8x1xf32, #tpu.memory_space<vmem>>, vector<8x1xf32>,
    %c0_i32_8 = arith.constant 0 : i32
    %12 = arith.cmpi eq, %arg1, %c0_i32_8 : i32
    %13 = arith.extui %12 : i1 to i32
    %c0_i32_9 = arith.constant 0 : i32
    %14 = arith.cmpi ne, %13, %c0_i32_9 : i32
    scf.if %14 {
      %c0_10 = arith.constant 0 : index
      %c0_11 = arith.constant 0 : index
      %15 = vector.load %arg5[%c0_10, %c0_11] : memref<8x1xf32, #tpu.memory_space<vmem>>, vector<8x1xf32>
      %c0_12 = arith.constant 0 : index
      %c0_13 = arith.constant 0 : index
      %16 = vector.load %arg4[%c0_12, %c0_13] : memref<8x1xf32, #tpu.memory_space<vmem>>, vector<8x1xf32>
      tpu.vector_store %arg4[%c0_12, %c0_13], %15 {strides = array<i32>} : memref<8x1xf32, #tpu.memory_space<vmem>>, vector<8x1xf32>,
    } else {
    }
    return
  }
  func.func @transform_0(%arg0: i32, %arg1: i32) -> (i32, i32) {
    %c0_i32 = arith.constant 0 : i32
    return %arg0, %arg1 : i32, i32
  }
  func.func @transform_1(%arg0: i32, %arg1: i32) -> (i32, i32) {
    %c0_i32 = arith.constant 0 : i32
    %c0_i32_0 = arith.constant 0 : i32
    return %c0_i32, %arg1 : i32, i32
  }
  func.func @transform_2(%arg0: i32, %arg1: i32) -> (i32, i32) {
    %c0_i32 = arith.constant 0 : i32
    %c0_i32_0 = arith.constant 0 : i32
    return %arg0, %c0_i32 : i32, i32
  }
}

</mosaic_0001>

<llo_original>
// kernel: tpu_custom_call.1
$region0: #{tpu_custom_call.1}
  #allocation0 [shape = 'u32[]', space=smem, size = 0x4, offset = 0x4, fixed_abs, tag = 'smem constant byte address 0x4 - core index']
  #allocation1 [shape = 'u32[144,128]{1,0:T(1,128)}', space=vmem, size = 0x12000, scoped, tag = 'internal scratch']
  #allocation2 [shape = 'f32[8,1]{1,0:T(8,128)}', space=vmem, size = 0x1000, scoped, tag = 'scratch operand']
  %s0 = inlined_call_operand.hbm [shape: f32[8,32], index: 0, kind: input, shape index: {}]
  %s1 = inlined_call_operand.vmem [shape: f32[1,32], index: 1, kind: input, shape index: {}]
  %s2 = inlined_call_operand.vmem [shape: f32[8,1], index: 2, kind: output, shape index: {}]
  %s3 = sld [smem:[#allocation0]]
  $region30: #{tpu_custom_call.1} parent=0
    _
  %s5 = ssub.s32 1, %s3
  %s6 = scalar_select 0, %s5, %s3
  $region1: #{tpu_custom_call.1} parent=0
    #allocation3 [shape = 'u8[4096]{0}', space=vmem, size = 0x1000, scoped, tag = 'input window, operand 0, single buffered']
    #allocation4 [shape = 's32[1]{0}', space=sflag, size = 0x4, scoped, tag = 'scoped memory for tpu_custom_call.1']
    %7 = vsyncpa [#allocation4], 0
    // Predicated region
    $region2: #{tpu_custom_call.1} parent=1 // pred_check
      _
    $region3: #{tpu_custom_call.1} parent=1 // pred_check_branch
      %9 = sbr.rel (0) target = $region5
    $region4: #{tpu_custom_call.1} parent=1 // pred_region
      %s11 = ssub.s32 128, 128
      %12 = vsyncadd [#allocation4], %s11
      %s14 = sshll.u32 [#allocation3], 4
      %s15 = int_to_ptr.vmem [resolvable:$true] %s14
      %17 = dma.hbm_to_vmem [thread:$0]  %s0, 128, %s15, [#allocation4]
    $region5: #{tpu_custom_call.1} parent=1 // pred_fallthru
      _
    // Predicated region
    $region6: #{tpu_custom_call.1} parent=1 // pred_check
      _
    $region7: #{tpu_custom_call.1} parent=1 // pred_check_branch
      %19 = sbr.rel (0) target = $region9
    $region8: #{tpu_custom_call.1} parent=1 // pred_region
      _
    $region9: #{tpu_custom_call.1} parent=1 // pred_fallthru
      _
    // Predicated region
    $region10: #{tpu_custom_call.1} parent=1 // pred_check
      _
    $region11: #{tpu_custom_call.1} parent=1 // pred_check_branch
      %21 = sbr.rel (0) target = $region13
    $region12: #{tpu_custom_call.1} parent=1 // pred_region
      %22 = dma.done [#allocation4], 128
    $region13: #{tpu_custom_call.1} parent=1 // pred_fallthru
      _
    %p23 = scmp.eq.s32.totalorder 0, 0
    // Predicated region
    $region14: #{tpu_custom_call.1} parent=1 // pred_check
      %p24 = pneg %p23
    $region15: #{tpu_custom_call.1} parent=1 // pred_check_branch
      %26 = sbr.rel (%p24) target = $region17
    $region16: #{tpu_custom_call.1} parent=1 // pred_region
      %vm27 = vcmask 7168
      %28 = vst.msk [vmem:[#allocation2] sm:$0xff] %vm27, 0.0
    $region17: #{tpu_custom_call.1} parent=1 // pred_fallthru
      _
    %v29 = vld [vmem:[#allocation3] sm:$0xff]
    %v30 = vld [vmem:[%s1] sm:$0x1]
    %v32 = vlaneseq
    %v33 = vshrl.u32 %v32, 7
    %v34 = vsub.s32 0, %v33
    %v35 = vrot.slane %v30, %v34
    %v37 = vmul.f32 %v29, %v35
    %v38 = vld [vmem:[#allocation2] sm:$0xff]
    %vm39 = vcmask 261120
    %v40 = vsel %vm39, %v37, 0.0
    %41 = vadd.xlane.f32.xlu0 %v40
    %v42 = vpop.xlane.xlu0 %41
    %v43 = vadd.f32 %v38, %v42
    %vm44 = vcmask 7168
    %45 = vst.msk [vmem:[#allocation2] sm:$0xff] %vm44, %v43
    // Predicated region
    $region18: #{tpu_custom_call.1} parent=1 // pred_check
      %p46 = pneg %p23
    $region19: #{tpu_custom_call.1} parent=1 // pred_check_branch
      %48 = sbr.rel (%p46) target = $region21
    $region20: #{tpu_custom_call.1} parent=1 // pred_region
      %v49 = vld [vmem:[#allocation2] sm:$0xff]
      %50 = vst.msk [vmem:[%s2] sm:$0xff] %vm44, %v49
    $region21: #{tpu_custom_call.1} parent=1 // pred_fallthru
      _
    // Predicated region
    $region22: #{tpu_custom_call.1} parent=1 // pred_check
      _
    $region23: #{tpu_custom_call.1} parent=1 // pred_check_branch
      %52 = sbr.rel (0) target = $region25
    $region24: #{tpu_custom_call.1} parent=1 // pred_region
      _
    $region25: #{tpu_custom_call.1} parent=1 // pred_fallthru
      _
    // Predicated region
    $region26: #{tpu_custom_call.1} parent=1 // pred_check
      _
    $region27: #{tpu_custom_call.1} parent=1 // pred_check_branch
      %54 = sbr.rel (0) target = $region29
    $region28: #{tpu_custom_call.1} parent=1 // pred_region
      _
    $region29: #{tpu_custom_call.1} parent=1 // pred_fallthru
      _
    %55 = vsyncpa [#allocation4], 1

</llo_original>
